<compile_context>
chip_gen: v6e
topology: v6e:2x2x1
jax: 0.10.0
libtpu: 0.0.40
codegen_flags: <defaults>
</compile_context>

<pallas_src>
import numpy as np
import jax
import jax.numpy as jnp
from jax.experimental import pallas as pl
from jax.experimental.pallas import tpu as pltpu


# ----------------------------------------------------------------------------
# Host-side operator folding (NumPy, float64/complex128)
# ----------------------------------------------------------------------------
def _build_flc_matrix(n_in: int, odd: bool) -> np.ndarray:
    """Complex (n_out x n_in) matrix equal to the per-axis FLC pipeline,
    acting on a padded axis of length n_in."""
    c0 = int((n_in + 1) / 4)
    c1 = int((n_in + 1) / 4 * 3)
    n_mid = c1 - c0

    k = np.arange(n_in)
    # forward DFT with norm='forward' (1/n per axis)
    F = np.exp(-2j * np.pi * np.outer(k, k) / n_in) / n_in
    # fftshift permutation: Xs[i] = X[(i - n//2) % n]
    Pshift = np.zeros((n_in, n_in))
    for i in range(n_in):
        Pshift[i, (i - n_in // 2) % n_in] = 1.0
    # window2d = sqrt(outer(w, w)) is separable -> diag(sqrt(w)) per axis
    w = np.abs(np.hamming(n_in))
    Dw = np.diag(np.sqrt(w))
    # center crop rows c0:c1
    Csel = np.zeros((n_mid, n_in))
    for p in range(n_mid):
        Csel[p, p + c0] = 1.0
    # ifftshift permutation on the cropped axis: Xi[q] = X[(q + n//2) % n]
    Pishift = np.zeros((n_mid, n_mid))
    for q in range(n_mid):
        Pishift[q, (q + n_mid // 2) % n_mid] = 1.0
    # inverse DFT with norm='forward' (no scaling on the inverse)
    m = np.arange(n_mid)
    G = np.exp(2j * np.pi * np.outer(m, m) / n_mid)

    L = G @ Pishift @ Csel @ Dw @ Pshift @ F          # (n_mid, n_in)
    return L[1:, :] if odd else L[:-1, :]


def _build_flc_operator(h: int, w: int, odd: bool):
    """Folded complex operator M (hw_out, hw_in); zero-pad columns dropped."""
    Lh = _build_flc_matrix(h + 1, odd)[:, :h]         # (hout, h)
    Lw = _build_flc_matrix(w + 1, odd)[:, :w]         # (wout, w)
    # vec_row(Lh @ X @ Lw^T) == (Lh (x) Lw) @ vec_row(X)
    return np.kron(Lh, Lw), Lh.shape[0], Lw.shape[0]


# ----------------------------------------------------------------------------
# Block-size selection
# ----------------------------------------------------------------------------
def _round_up(x: int, m: int) -> int:
    return ((x + m - 1) // m) * m


def _sublane_multiple(dtype) -> int:
    # min sublane packing of the HBM-side input tile: 8 (f32), 16 (bf16), 32 (int8)
    return max(8, 32 // np.dtype(dtype).itemsize)


def _pick_block_rows(nc: int, sub: int) -> int:
    """Rows (flattened images) per grid step.

    Small batches go in one full-extent block (always a legal tile).  Larger
    batches aim for >= 8 grid steps (>= 3-4 per TensorCore on v7x so the
    BlockSpec pipeline can hide the DMAs) with 64-512-row blocks, rounded to
    the input dtype's sublane packing and snapped to a divisor of nc when one
    is nearby so the tail block is not ragged.
    """
    num_blocks = max(min(nc // 64, 8), nc // 512)
    if num_blocks <= 1:
        return nc
    bb = _round_up(-(-nc // num_blocks), sub)
    for cand in range(bb, max(bb // 2, sub) - 1, -sub):
        if nc % cand == 0:
            return cand
    return bb      # ragged tail: Pallas masks the OOB writes of the edge block


# ----------------------------------------------------------------------------
# Pallas kernel
# ----------------------------------------------------------------------------
def _flc_kernel(x_ref, m_ref, o_ref):
    # x_ref : (block_b, H*W)         flattened images, HBM dtype (f32)
    # m_ref : (H*W, 2*Hout*Wout)     packed operator [Re(M)^T | Im(M)^T], bf16
    # o_ref : (block_b, Hout*Wout)   f32 magnitudes
    x = x_ref[...].astype(m_ref.dtype)            # in-kernel bf16 cast (VPU)
    z = jnp.dot(x, m_ref[...], preferred_element_type=jnp.float32)
    hw_out = o_ref.shape[-1]
    s = z * z
    if (2 * hw_out) % 128 == 0:
        # lanes [0,hw_out) hold Re^2, [hw_out,2*hw_out) hold Im^2; an XLU
        # lane-rotate adds them without splitting a vreg at lane hw_out.
        s = s + pltpu.roll(s, shift=hw_out, axis=1)
        o_ref[...] = jnp.sqrt(s[:, :hw_out]).astype(o_ref.dtype)
    else:
        o_ref[...] = jnp.sqrt(s[:, :hw_out] + s[:, hw_out:]).astype(o_ref.dtype)


def flc_pooling(x, odd=True, compute_dtype=jnp.bfloat16):
    """Pallas-TPU FLC pooling on an NCHW batch.  Returns float32 (N,C,H/2,W/2)."""
    n, c, h, w = x.shape
    M, hout, wout = _build_flc_operator(h, w, odd)
    hw_in, hw_out = h * w, hout * wout

    # Packed real operator: one dot produces [Re | Im] of M @ vec(image).
    mcat_np = np.concatenate([M.real.T, M.imag.T], axis=1).astype(np.float32)
    mcat = jnp.asarray(mcat_np, compute_dtype)        # (hw_in, 2*hw_out)

    nc = n * c
    xf = x.reshape(nc, hw_in)          # metadata-only reshape; no cast, no pad

    block_b = _pick_block_rows(nc, _sublane_multiple(x.dtype))
    grid = (pl.cdiv(nc, block_b),)

    out = pl.pallas_call(
        _flc_kernel,
        out_shape=jax.ShapeDtypeStruct((nc, hw_out), jnp.float32),
        grid=grid,
        in_specs=[
            pl.BlockSpec((block_b, hw_in), lambda i: (i, 0)),
            pl.BlockSpec((hw_in, 2 * hw_out), lambda i: (0, 0)),
        ],
        out_specs=pl.BlockSpec((block_b, hw_out), lambda i: (i, 0)),
        compiler_params=pltpu.CompilerParams(
            dimension_semantics=("parallel",),
        ),
    )(xf, mcat)

    return out.reshape(n, c, hout, wout)


# ----------------------------------------------------------------------------
# Pure-JAX reference (replica of the PyTorch forward, for verification)
# ----------------------------------------------------------------------------
def flc_pooling_reference(x, odd=True):
    xp = jnp.pad(x.astype(jnp.float32), ((0, 0), (0, 0), (0, 1), (0, 1)))
    X = jnp.fft.fftshift(jnp.fft.fft2(xp, norm='forward'), axes=(-2, -1))
    w1 = np.abs(np.hamming(xp.shape[2]))
    w2 = np.abs(np.hamming(xp.shape[3]))
    X = X * jnp.asarray(np.sqrt(np.outer(w1, w2)), jnp.complex64)
    h, wd = xp.shape[2], xp.shape[3]
    X = X[:, :, int((h + 1) / 4):int((h + 1) / 4 * 3),
          int((wd + 1) / 4):int((wd + 1) / 4 * 3)]
    out = jnp.abs(jnp.fft.ifft2(jnp.fft.ifftshift(X, axes=(-2, -1)),
                                norm='forward'))
    return out[:, :, 1:, 1:] if odd else out[:, :, :-1, :-1]


if __name__ == "__main__":
    key = jax.random.PRNGKey(0)
    x = jax.random.normal(key, (2, 4, 16, 16), dtype=jnp.float32)

    ref = jax.block_until_ready(flc_pooling_reference(x, odd=True))
    ref_np = np.asarray(ref)

    # Host-side float64 check of the folded operator (tight tolerance catches
    # operator-folding bugs independently of MXU precision / bf16 operands).
    M, hout, wout = _build_flc_operator(16, 16, odd=True)
    folded = np.abs(np.asarray(x, np.float64).reshape(-1, 16 * 16) @ M.T)
    folded = folded.reshape(2, 4, hout, wout)
    assert np.allclose(folded, ref_np, atol=1e-4, rtol=1e-4), (
        float(np.max(np.abs(folded - ref_np))))

    # TPU Pallas kernel (bf16 MXU operands, f32 accumulate, f32 output).
    out = jax.block_until_ready(flc_pooling(x, odd=True))
    out_np = np.asarray(out)
    assert out.shape == (2, 4, 8, 8), out.shape
    assert np.allclose(out_np, ref_np, atol=4e-2, rtol=4e-2), (
        float(np.max(np.abs(out_np - ref_np))))

    print("KERNEL_OK")
</pallas_src>

<mosaic_0001>
module attributes {stable_mosaic.version = 11 : i64} {
  func.func @_flc_kernel(%arg0: i32, %arg1: memref<8x256xf32, #tpu.memory_space<vmem>>, %arg2: memref<256x128xbf16, #tpu.memory_space<vmem>>, %arg3: memref<8x64xf32, #tpu.memory_space<vmem>>) attributes {dimension_semantics = [#tpu.dimension_semantics<parallel>], iteration_bounds = array<i64: 1>, scalar_prefetch = 0 : i64, scratch_operands = 0 : i64, tpu.core_type = #tpu.core_type<tc>, window_params = [{transform_indices = @transform_0, window_bounds = array<i64: 8, 256>}, {pipeline_mode = #tpu.pipeline_mode<synchronous>, transform_indices = @transform_1, window_bounds = array<i64: 256, 128>}, {transform_indices = @transform_2, window_bounds = array<i64: 8, 64>}]} {
    %c0 = arith.constant 0 : index
    %c0_0 = arith.constant 0 : index
    %0 = vector.load %arg1[%c0, %c0_0] : memref<8x256xf32, #tpu.memory_space<vmem>>, vector<8x256xf32>
    %1 = arith.truncf %0 : vector<8x256xf32> to vector<8x256xbf16>
    %c0_1 = arith.constant 0 : index
    %c0_2 = arith.constant 0 : index
    %2 = vector.load %arg2[%c0_1, %c0_2] : memref<256x128xbf16, #tpu.memory_space<vmem>>, vector<256x128xbf16>
    %cst = arith.constant dense<0.000000e+00> : vector<8x128xf32>
    %3 = tpu.matmul %1, %2, %cst {dimension_numbers = #tpu.dot_dimension_numbers<[1], [0], [0], [1], [0, 0, 1, 1], [], []>} : vector<8x256xbf16>, vector<256x128xbf16>, vector<8x128xf32> -> vector<8x128xf32>
    %4 = arith.mulf %3, %3 : vector<8x128xf32>
    %c64_i32 = arith.constant 64 : i32
    %5 = tpu.dynamic_rotate %4 by %c64_i32 dim 1 : vector<8x128xf32>, i32 -> vector<8x128xf32>
    %6 = arith.addf %4, %5 : vector<8x128xf32>
    %7 = vector.extract_strided_slice %6 {offsets = [0, 0], sizes = [8, 64], strides = [1, 1]} : vector<8x128xf32> to vector<8x64xf32>
    %8 = math.sqrt %7 : vector<8x64xf32>
    %c0_3 = arith.constant 0 : index
    %c0_4 = arith.constant 0 : index
    %9 = vector.load %arg3[%c0_3, %c0_4] : memref<8x64xf32, #tpu.memory_space<vmem>>, vector<8x64xf32>
    tpu.vector_store %arg3[%c0_3, %c0_4], %8 {strides = array<i32>} : memref<8x64xf32, #tpu.memory_space<vmem>>, vector<8x64xf32>,
    return
  }
  func.func @transform_0(%arg0: i32) -> (i32, i32) {
    %c0_i32 = arith.constant 0 : i32
    %c0_i32_0 = arith.constant 0 : i32
    return %arg0, %c0_i32 : i32, i32
  }
  func.func @transform_1(%arg0: i32) -> (i32, i32) {
    %c0_i32 = arith.constant 0 : i32
    %c0_i32_0 = arith.constant 0 : i32
    %c0_i32_1 = arith.constant 0 : i32
    return %c0_i32, %c0_i32_0 : i32, i32
  }
  func.func @transform_2(%arg0: i32) -> (i32, i32) {
    %c0_i32 = arith.constant 0 : i32
    %c0_i32_0 = arith.constant 0 : i32
    return %arg0, %c0_i32 : i32, i32
  }
}

</mosaic_0001>

<llo_original>
// kernel: tpu_custom_call.1
$region0: #{tpu_custom_call.1}
  #allocation0 [shape = 'u32[]', space=smem, size = 0x4, offset = 0x4, fixed_abs, tag = 'smem constant byte address 0x4 - core index']
  #allocation1 [shape = 'u32[144,128]{1,0:T(1,128)}', space=vmem, size = 0x12000, scoped, tag = 'internal scratch']
  %s0 = inlined_call_operand.hbm [shape: f32[8,256], index: 0, kind: input, shape index: {}]
  %s1 = inlined_call_operand.hbm [shape: bf16[256,128], index: 1, kind: input, shape index: {}]
  %s2 = inlined_call_operand.hbm [shape: f32[8,64], index: 2, kind: output, shape index: {}]
  %s3 = sld [smem:[#allocation0]]
  $region26: #{tpu_custom_call.1} parent=0
    _
  %s5 = ssub.s32 1, %s3
  %s6 = scalar_select 0, %s5, %s3
  $region1: #{tpu_custom_call.1} parent=0
    #allocation2 [shape = 'u8[8192]{0}', space=vmem, size = 0x2000, scoped, tag = 'input window, operand 0, single buffered']
    #allocation3 [shape = 's32[1]{0}', space=sflag, size = 0x4, scoped, tag = 'scoped memory for tpu_custom_call.1']
    #allocation4 [shape = 's32[1]{0}', space=sflag, size = 0x4, scoped, tag = 'scoped memory for tpu_custom_call.1']
    #allocation5 [shape = 'u8[65536]{0}', space=vmem, size = 0x10000, scoped, tag = 'input window, operand 1, single buffered']
    #allocation6 [shape = 's32[1]{0}', space=sflag, size = 0x4, scoped, tag = 'scoped memory for tpu_custom_call.1']
    #allocation7 [shape = 'u8[4096]{0}', space=vmem, size = 0x1000, scoped, tag = 'output window, operand 0, single buffered']
    %7 = vsyncpa [#allocation3], 0
    %8 = vsyncpa [#allocation6], 0
    %9 = vsyncpa [#allocation4], 0
    // Predicated region
    $region2: #{tpu_custom_call.1} parent=1 // pred_check
      _
    $region3: #{tpu_custom_call.1} parent=1 // pred_check_branch
      %11 = sbr.rel (0) target = $region5
    $region4: #{tpu_custom_call.1} parent=1 // pred_region
      %s13 = ssub.s32 256, 256
      %14 = vsyncadd [#allocation3], %s13
      %s16 = sshll.u32 [#allocation2], 4
      %s17 = int_to_ptr.vmem [resolvable:$true] %s16
      %19 = dma.hbm_to_vmem [thread:$0]  %s0, 256, %s17, [#allocation3]
    $region5: #{tpu_custom_call.1} parent=1 // pred_fallthru
      _
    // Predicated region
    $region6: #{tpu_custom_call.1} parent=1 // pred_check
      _
    $region7: #{tpu_custom_call.1} parent=1 // pred_check_branch
      %21 = sbr.rel (0) target = $region9
    $region8: #{tpu_custom_call.1} parent=1 // pred_region
      %s23 = ssub.s32 2048, 2048
      %24 = vsyncadd [#allocation6], %s23
      %s25 = sshll.u32 [#allocation5], 4
      %s26 = int_to_ptr.vmem [resolvable:$true] %s25
      %31 = dma.hbm_to_vmem [thread:$0]  %s1, 2048, %s26, [#allocation6], 64, 64, 4
    $region9: #{tpu_custom_call.1} parent=1 // pred_fallthru
      _
    // Predicated region
    $region10: #{tpu_custom_call.1} parent=1 // pred_check
      _
    $region11: #{tpu_custom_call.1} parent=1 // pred_check_branch
      %33 = sbr.rel (0) target = $region13
    $region12: #{tpu_custom_call.1} parent=1 // pred_region
      %34 = dma.done [#allocation3], 256
    $region13: #{tpu_custom_call.1} parent=1 // pred_fallthru
      _
    // Predicated region
    $region14: #{tpu_custom_call.1} parent=1 // pred_check
      _
    $region15: #{tpu_custom_call.1} parent=1 // pred_check_branch
      %36 = sbr.rel (0) target = $region17
    $region16: #{tpu_custom_call.1} parent=1 // pred_region
      %37 = dma.done [#allocation6], 2048
    $region17: #{tpu_custom_call.1} parent=1 // pred_fallthru
      _
    %v39 = vld [vmem:[#allocation2] sm:$0xff]
    %v40 = vld [vmem:[#allocation2 + $0x8] sm:$0xff]
    %v41 = vpack.c.bf16 %v39, %v39
    %v42 = vpack.c.bf16 %v40, %v40
    %v43 = vld [vmem:[#allocation5] sm:$0xf]
    %v44 = vld [vmem:[#allocation5 + $0x4] sm:$0xf]
    %v45 = vld [vmem:[#allocation5 + $0x8] sm:$0xf]
    %v46 = vld [vmem:[#allocation5 + $0xc] sm:$0xf]
    %v47 = vld [vmem:[#allocation5 + $0x10] sm:$0xf]
    %v48 = vld [vmem:[#allocation5 + $0x14] sm:$0xf]
    %v49 = vld [vmem:[#allocation5 + $0x18] sm:$0xf]
    %v50 = vld [vmem:[#allocation5 + $0x1c] sm:$0xf]
    %v51 = vld [vmem:[#allocation5 + $0x20] sm:$0xf]
    %v52 = vld [vmem:[#allocation5 + $0x24] sm:$0xf]
    %v53 = vld [vmem:[#allocation5 + $0x28] sm:$0xf]
    %v54 = vld [vmem:[#allocation5 + $0x2c] sm:$0xf]
    %v55 = vld [vmem:[#allocation5 + $0x30] sm:$0xf]
    %v56 = vld [vmem:[#allocation5 + $0x34] sm:$0xf]
    %v57 = vld [vmem:[#allocation5 + $0x38] sm:$0xf]
    %v58 = vld [vmem:[#allocation5 + $0x3c] sm:$0xf]
    %v59 = vld [vmem:[#allocation5 + $0x40] sm:$0xf]
    %v60 = vld [vmem:[#allocation5 + $0x44] sm:$0xf]
    %v61 = vld [vmem:[#allocation5 + $0x48] sm:$0xf]
    %v62 = vld [vmem:[#allocation5 + $0x4c] sm:$0xf]
    %v63 = vld [vmem:[#allocation5 + $0x50] sm:$0xf]
    %v64 = vld [vmem:[#allocation5 + $0x54] sm:$0xf]
    %v65 = vld [vmem:[#allocation5 + $0x58] sm:$0xf]
    %v66 = vld [vmem:[#allocation5 + $0x5c] sm:$0xf]
    %v67 = vld [vmem:[#allocation5 + $0x60] sm:$0xf]
    %v68 = vld [vmem:[#allocation5 + $0x64] sm:$0xf]
    %v69 = vld [vmem:[#allocation5 + $0x68] sm:$0xf]
    %v70 = vld [vmem:[#allocation5 + $0x6c] sm:$0xf]
    %v71 = vld [vmem:[#allocation5 + $0x70] sm:$0xf]
    %v72 = vld [vmem:[#allocation5 + $0x74] sm:$0xf]
    %v73 = vld [vmem:[#allocation5 + $0x78] sm:$0xf]
    %v74 = vld [vmem:[#allocation5 + $0x7c] sm:$0xf]
    %v107 = vunpack.c.l.b16 %v43
    %v108 = vunpack.c.l.b16 %v44
    %v109 = vunpack.c.l.b16 %v45
    %v110 = vunpack.c.l.b16 %v46
    %v111 = vunpack.c.l.b16 %v47
    %v112 = vunpack.c.l.b16 %v48
    %v113 = vunpack.c.l.b16 %v49
    %v114 = vunpack.c.l.b16 %v50
    %v115 = vunpack.c.l.b16 %v51
    %v116 = vunpack.c.l.b16 %v52
    %v117 = vunpack.c.l.b16 %v53
    %v118 = vunpack.c.l.b16 %v54
    %v119 = vunpack.c.l.b16 %v55
    %v120 = vunpack.c.l.b16 %v56
    %v121 = vunpack.c.l.b16 %v57
    %v122 = vunpack.c.l.b16 %v58
    %v123 = vunpack.c.l.b16 %v59
    %v124 = vunpack.c.l.b16 %v60
    %v125 = vunpack.c.l.b16 %v61
    %v126 = vunpack.c.l.b16 %v62
    %v127 = vunpack.c.l.b16 %v63
    %v128 = vunpack.c.l.b16 %v64
    %v129 = vunpack.c.l.b16 %v65
    %v130 = vunpack.c.l.b16 %v66
    %v131 = vunpack.c.l.b16 %v67
    %v132 = vunpack.c.l.b16 %v68
    %v133 = vunpack.c.l.b16 %v69
    %v134 = vunpack.c.l.b16 %v70
    %v135 = vunpack.c.l.b16 %v71
    %v136 = vunpack.c.l.b16 %v72
    %v137 = vunpack.c.l.b16 %v73
    %v138 = vunpack.c.l.b16 %v74
    %v139 = vpack.c.b16 %v108, %v107
    %v140 = vpack.c.b16 %v110, %v109
    %v141 = vpack.c.b16 %v112, %v111
    %v142 = vpack.c.b16 %v114, %v113
    %v143 = vpack.c.b16 %v116, %v115
    %v144 = vpack.c.b16 %v118, %v117
    %v145 = vpack.c.b16 %v120, %v119
    %v146 = vpack.c.b16 %v122, %v121
    %v147 = vpack.c.b16 %v124, %v123
    %v148 = vpack.c.b16 %v126, %v125
    %v149 = vpack.c.b16 %v128, %v127
    %v150 = vpack.c.b16 %v130, %v129
    %v151 = vpack.c.b16 %v132, %v131
    %v152 = vpack.c.b16 %v134, %v133
    %v153 = vpack.c.b16 %v136, %v135
    %v154 = vpack.c.b16 %v138, %v137
    %171 = vmatprep.subr.bf16.mxu0 0
    %172 = vmatpush1.bf16.msra.mxu0 %v146
    %173 = vmatprep.subr.bf16.mxu0 0
    %174 = vmatpush1.bf16.msra.mxu0 %v145
    %175 = vmatprep.subr.bf16.mxu0 0
    %176 = vmatpush1.bf16.msra.mxu0 %v144
    %177 = vmatprep.subr.bf16.mxu0 0
    %178 = vmatpush1.bf16.msra.mxu0 %v143
    %179 = vmatprep.subr.bf16.mxu0 0
    %180 = vmatpush1.bf16.msra.mxu0 %v142
    %181 = vmatprep.subr.bf16.mxu0 0
    %182 = vmatpush1.bf16.msra.mxu0 %v141
    %183 = vmatprep.subr.bf16.mxu0 0
    %184 = vmatpush1.bf16.msra.mxu0 %v140
    %185 = vmatprep.subr.bf16.mxu0 0
    %186 = vmatpush1.bf16.msra.mxu0 %v139
    %187 = vmatprep.subr.bf16.mxu0 0
    %188 = vmatpush2.bf16.msra.mxu0 %v154
    %189 = vmatprep.subr.bf16.mxu0 0
    %190 = vmatpush2.bf16.msra.mxu0 %v153
    %191 = vmatprep.subr.bf16.mxu0 0
    %192 = vmatpush2.bf16.msra.mxu0 %v152
    %193 = vmatprep.subr.bf16.mxu0 0
    %194 = vmatpush2.bf16.msra.mxu0 %v151
    %195 = vmatprep.subr.bf16.mxu0 0
    %196 = vmatpush2.bf16.msra.mxu0 %v150
    %197 = vmatprep.subr.bf16.mxu0 0
    %198 = vmatpush2.bf16.msra.mxu0 %v149
    %199 = vmatprep.subr.bf16.mxu0 0
    %200 = vmatpush2.bf16.msra.mxu0 %v148
    %201 = vmatprep.subr.bf16.mxu0 0
    %202 = vmatpush2.bf16.msra.mxu0 %v147
    %203 = vmatprep.mubr.bf16.mxu0 %v42
    %204 = vmatmul.mubr.bf16.gmra.mxu0 %v41
    %v205 = vpop.f32.mrf.mxu0
    %v206 = vadd.f32 0.0, %v205
    %v207 = vpop.f32.mrf.mxu0
    %v208 = vpop.f32.mrf.mxu0
    %v209 = vpop.f32.mrf.mxu0
    %210 = vdwg.mxu0
    %v211 = vmul.f32 %v206, %v206
    %212 = vrot.lane.b32.xlu0 %v211, 64
    %v213 = vpop.permute.xlu0 %212
    %v214 = vadd.f32 %v211, %v213
    %v215 = vrsqrt.pop %v214
    %v216 = vmul.f32 %v214, %v215
    %vm217 = vcmp.eq.f32.partialorder %v214, inf
    %v218 = vsel %vm217, %v214, %v216
    %vm219 = vcmp.eq.f32.partialorder %v214, 0.0
    %v220 = vand.u32 %v214, 2147483648
    %v221 = vsel %vm219, %v220, %v218
    %vm222 = vcmask 523264
    %223 = vst.msk [vmem:[#allocation7] sm:$0xff] %vm222, %v221
    // Predicated region
    $region18: #{tpu_custom_call.1} parent=1 // pred_check
      _
    $region19: #{tpu_custom_call.1} parent=1 // pred_check_branch
      %225 = sbr.rel (0) target = $region21
    $region20: #{tpu_custom_call.1} parent=1 // pred_region
      %s227 = ssub.s32 128, 128
      %228 = vsyncadd [#allocation4], %s227
      %s230 = sshll.u32 [#allocation7], 4
      %s231 = int_to_ptr.vmem [resolvable:$true] %s230
      %233 = dma.vmem_to_hbm [thread:$0]  %s231, 128, %s2, [#allocation4]
    $region21: #{tpu_custom_call.1} parent=1 // pred_fallthru
      _
    // Predicated region
    $region22: #{tpu_custom_call.1} parent=1 // pred_check
      _
    $region23: #{tpu_custom_call.1} parent=1 // pred_check_branch
      %235 = sbr.rel (0) target = $region25
    $region24: #{tpu_custom_call.1} parent=1 // pred_region
      %236 = dma.done [#allocation4], 128
    $region25: #{tpu_custom_call.1} parent=1 // pred_fallthru
      _
    %237 = vsyncpa [#allocation3], 1
    %238 = vsyncpa [#allocation6], 1
    %239 = vsyncpa [#allocation4], 1

</llo_original>
